<compile_context>
chip_gen: v6e
topology: v6e:2x2x1
jax: 0.10.0
libtpu: 0.0.40
codegen_flags: <defaults>
</compile_context>

<pallas_src>
import numpy as np
import jax
import jax.numpy as jnp
from jax.experimental import pallas as pl
from jax.experimental.pallas import tpu as pltpu


# --------------------------------------------------------------------------
# Fused Pallas kernel: (batched-P) LBS weight blend + affine apply + per-point
# activations, gridded over vertex (lane) tiles only.
#
# Inputs  : A   [P*16, Jp]   per-pose joint transforms (flat 4x4, transl folded)
#           W   [Jp,  V]     padded transposed LBS weights (+ unit transl row)
#           v   [P*3, V]     displaced rest vertices, coords on sublanes
#           x   [8,   V]     packed raw opacity/scales/rotations
# Outputs : T   [P*16, V]    blended per-vertex transforms (rows 12..15 unused)
#           pv  [P*3, V]     posed vertices
#           act [8,   V]     sigmoid(opacity), exp(scales), normalize(rot)
# --------------------------------------------------------------------------
def _make_lbs_act_kernel(num_players):
    P = num_players

    def kernel(a_ref, w_ref, v_ref, x_ref, t_ref, pv_ref, act_ref):
        A = a_ref[...]                                            # [P*16, Jp]
        W = w_ref[...]                                            # [Jp, tV]
        T = jnp.dot(A, W, preferred_element_type=jnp.float32)     # MXU, [P*16, tV]
        t_ref[...] = T                                            # straight store

        v = v_ref[...]                                            # [P*3, tV]
        rows = []
        for p in range(P):                                        # tiny static unroll
            Tp = T[p * 16:(p + 1) * 16]
            vx = v[3 * p + 0: 3 * p + 1]
            vy = v[3 * p + 1: 3 * p + 2]
            vz = v[3 * p + 2: 3 * p + 3]
            rows.append(Tp[0:1] * vx + Tp[1:2] * vy + Tp[2:3] * vz + Tp[3:4])
            rows.append(Tp[4:5] * vx + Tp[5:6] * vy + Tp[6:7] * vz + Tp[7:8])
            rows.append(Tp[8:9] * vx + Tp[9:10] * vy + Tp[10:11] * vz + Tp[11:12])
        pv_ref[...] = jnp.concatenate(rows, axis=0)               # [P*3, tV]

        x = x_ref[...]                                            # [8, tV]
        opa = jax.nn.sigmoid(x[0:1])
        sca = jnp.exp(x[1:4])
        r = x[4:8]
        sumsq = (r[0:1] * r[0:1] + r[1:2] * r[1:2]
                 + r[2:3] * r[2:3] + r[3:4] * r[3:4])
        inv = jax.lax.rsqrt(jnp.maximum(sumsq, 1e-24))            # 1/max(||r||,1e-12)
        act_ref[...] = jnp.concatenate([opa, sca, r * inv], axis=0)

    return kernel


def _pick_v_tile(V, max_tile=4096):
    """Largest multiple-of-128 divisor of V that is <= max_tile (else whole V)."""
    if V <= max_tile:
        return V
    t = max_tile - (max_tile % 128)
    for cand in range(t, 0, -128):
        if V % cand == 0:
            return cand
    return V


def lbs_act_fused_pallas(A_t, W_t, v_t, act_in, *, num_players):
    """A_t [P*16, Jp], W_t [Jp, V], v_t [P*3, V], act_in [8, V]."""
    P = num_players
    Jp, V = W_t.shape
    tV = _pick_v_tile(V)
    nt = V // tV

    # per-tile VMEM working set (double-buffered blocks), with generous slack
    bytes_per_tile = 4 * (Jp * tV + P * 3 * tV + 8 * tV
                          + P * 16 * tV + P * 3 * tV + 8 * tV + P * 16 * Jp)
    vmem_limit = int(min(32 << 20, max(4 << 20, 4 * bytes_per_tile)))

    cost = pl.CostEstimate(
        flops=int(2 * (P * 16) * Jp * V + 18 * P * V + 16 * V),
        transcendentals=int(5 * V),
        bytes_accessed=int(4 * (P * 16 * Jp + Jp * V + P * 3 * V + 8 * V
                                + P * 16 * V + P * 3 * V + 8 * V)))

    return pl.pallas_call(
        _make_lbs_act_kernel(P),
        out_shape=(
            jax.ShapeDtypeStruct((P * 16, V), jnp.float32),
            jax.ShapeDtypeStruct((P * 3, V), jnp.float32),
            jax.ShapeDtypeStruct((8, V), jnp.float32),
        ),
        grid=(nt,),
        in_specs=[
            pl.BlockSpec((P * 16, Jp), lambda v: (0, 0)),   # resident across tiles
            pl.BlockSpec((Jp, tV), lambda v: (0, v)),
            pl.BlockSpec((P * 3, tV), lambda v: (0, v)),
            pl.BlockSpec((8, tV), lambda v: (0, v)),
        ],
        out_specs=(
            pl.BlockSpec((P * 16, tV), lambda v: (0, v)),
            pl.BlockSpec((P * 3, tV), lambda v: (0, v)),
            pl.BlockSpec((8, tV), lambda v: (0, v)),
        ),
        compiler_params=pltpu.CompilerParams(
            dimension_semantics=("parallel",),
            vmem_limit_bytes=vmem_limit),
        cost_estimate=cost,
    )(A_t, W_t, v_t, act_in)


# --------------------------------------------------------------------------
# Small JAX glue: Rodrigues + kinematic chain (log-depth) and normals
# --------------------------------------------------------------------------
def batch_rodrigues(rot_vecs):
    angle = jnp.linalg.norm(rot_vecs + 1e-8, axis=1, keepdims=True)      # [B,1]
    rot_dir = rot_vecs / angle
    cos = jnp.cos(angle)[:, None]                                        # [B,1,1]
    sin = jnp.sin(angle)[:, None]
    rx, ry, rz = rot_dir[:, 0], rot_dir[:, 1], rot_dir[:, 2]
    zeros = jnp.zeros_like(rx)
    K = jnp.stack([zeros, -rz, ry, rz, zeros, -rx, -ry, rx, zeros],
                  axis=1).reshape(-1, 3, 3)
    ident = jnp.eye(3, dtype=rot_vecs.dtype)[None]
    return ident + sin * K + (1.0 - cos) * (K @ K)


def lbs_rel_transforms(full_pose, J, parents):
    """full_pose [P,NJ,3] axis-angle, J [P,NJ,3], parents np.int array (static)."""
    P, NJ, _ = full_pose.shape
    rot_mats = batch_rodrigues(full_pose.reshape(-1, 3)).reshape(P, NJ, 3, 3)
    parents_np = np.asarray(parents)
    rel_joints = jnp.concatenate(
        [J[:, :1], J[:, 1:] - J[:, parents_np[1:]]], axis=1)             # [P,NJ,3]
    top = jnp.concatenate([rot_mats, rel_joints[..., None]], axis=-1)    # [P,NJ,3,4]
    bottom = jnp.broadcast_to(
        jnp.array([0.0, 0.0, 0.0, 1.0], dtype=full_pose.dtype), (P, NJ, 1, 4))
    tm = jnp.concatenate([top, bottom], axis=-2)                         # [P,NJ,4,4]

    if bool(np.all(parents_np[1:] == np.arange(NJ - 1))):
        # Pure chain: cumulative composition == prefix matmul scan (log depth).
        transforms = jax.lax.associative_scan(
            lambda a, b: jnp.matmul(a, b), tm, axis=1)
    else:
        # TODO(synk): general kinematic trees fall back to the sequential chain
        # (no clean parallel-scan form without grouping joints by depth).
        chain = [tm[:, 0]]
        for i in range(1, NJ):
            chain.append(jnp.matmul(chain[int(parents_np[i])], tm[:, i]))
        transforms = jnp.stack(chain, axis=1)                            # [P,NJ,4,4]

    tj = jnp.einsum('pjrc,pjc->pjr', transforms[..., :3], J)             # [P,NJ,4]
    rel = jnp.concatenate(
        [transforms[..., :3], transforms[..., 3:4] - tj[..., None]], axis=-1)
    return rel                                                           # [P,NJ,4,4]


def build_pose_matrix(A, transl, Jp):
    """A [P,NJ,4,4] -> [P*16, Jp] with transl folded into extra joint column."""
    P, NJ = A.shape[0], A.shape[1]
    A_t = jnp.zeros((P, 16, Jp), jnp.float32)
    A_t = A_t.at[:, :, :NJ].set(jnp.swapaxes(A.reshape(P, NJ, 16), 1, 2))
    A_t = A_t.at[:, 3, NJ].set(transl[:, 0])
    A_t = A_t.at[:, 7, NJ].set(transl[:, 1])
    A_t = A_t.at[:, 11, NJ].set(transl[:, 2])
    return A_t.reshape(P * 16, Jp)


def build_normal_operators(faces_np, n_verts):
    """Static face operators: corner-difference selectors and incidence matrix."""
    F = faces_np.shape[0]
    S = []
    for c in range(3):
        m = np.zeros((F, n_verts), np.float32)
        m[np.arange(F), faces_np[:, c]] = 1.0
        S.append(m)
    D1 = S[2] - S[1]                       # selects (v2 - v1)
    D2 = S[0] - S[1]                       # selects (v0 - v1)
    incidence = (S[0] + S[1] + S[2]).T     # [n_verts, F] per-corner accumulation
    return jnp.asarray(D1), jnp.asarray(D2), jnp.asarray(incidence)


def compute_vertex_normals(verts, D1, D2, incidence):
    # TODO(synk): pytorch3d's index_add scatter has no clean Pallas TPU form;
    # the accumulation is a precomputed static incidence-matrix matmul instead.
    e1 = D1 @ verts                        # [F, 3]
    e2 = D2 @ verts                        # [F, 3]
    fn = jnp.cross(e1, e2)                 # face normals (same per corner)
    vn = incidence @ fn                    # [n_verts, 3] scatter-add as matmul
    nrm = jnp.linalg.norm(vn, axis=-1, keepdims=True)
    return vn / jnp.maximum(nrm, 1e-6)


# --------------------------------------------------------------------------
# Deterministic synthetic parameter initialization (mirrors __init__ shapes);
# all static layout plumbing (W_t, act slab, normal operators) hoisted here.
# --------------------------------------------------------------------------
def init_params(key, num_players=1, V=384, num_repeat=2, NJ=24, F=512):
    ks = jax.random.split(key, 8)
    v_template = jax.random.normal(ks[0], (V, 3), jnp.float32)
    v_template = v_template - v_template.mean(0)                          # centered
    weights = jax.nn.softmax(2.0 * jax.random.normal(ks[1], (V, NJ)), axis=-1)
    J = 0.5 * jax.random.normal(ks[2], (NJ, 3), jnp.float32)

    parents = np.concatenate([[-1], np.arange(NJ - 1)]).astype(np.int64)  # chain tree
    faces_np = np.array(jax.random.randint(ks[3], (F, 3), 0, V))          # [F, 3]

    N = V * num_repeat
    n = N * num_players
    Jp = max(32, int(-(-(NJ + 1) // 8) * 8))                              # >= NJ+1, x8

    opacity = jnp.ones((n, 1), jnp.float32) * 0.99
    scales = 0.1 * jax.random.normal(ks[4], (n, 3), jnp.float32) - 3.0
    rotations = jax.random.normal(ks[5], (N, 4), jnp.float32)

    weights_full = jnp.tile(weights, (num_repeat, 1))                     # [N, NJ]
    # verts2uv_idx is the identity arange over the first V rows -> slice at init.
    W_t = jnp.zeros((Jp, V), jnp.float32)
    W_t = W_t.at[:NJ].set(weights_full[:V].T)
    W_t = W_t.at[NJ].set(1.0)                 # extra joint carries global transl
    act_in = jnp.concatenate(
        [opacity[:V].T, scales[:V].T, rotations[:V].T], axis=0)           # [8, V]

    D1, D2, incidence = build_normal_operators(faces_np, num_players * V)

    params = dict(
        num_players=num_players,
        Jp=Jp,
        V=V,
        v_template=jnp.tile(v_template[None], (num_players, num_repeat, 1)),  # [P,N,3]
        J=jnp.tile(J[None], (num_players, 1, 1)),                             # [P,NJ,3]
        parents=parents,
        faces=jnp.asarray(faces_np, dtype=jnp.int32)[None],                   # [1,F,3]
        displacements=jnp.zeros((num_players, N, 3), jnp.float32),
        W_t=W_t,
        act_in=act_in,
        D1=D1, D2=D2, incidence=incidence,
        shs_dc=jnp.zeros((n, 1, 3), jnp.float32),
        shs_rest=jnp.zeros((n, 0, 3), jnp.float32),   # max_sh_degree=0
    )
    return params


# --------------------------------------------------------------------------
# forward (matches SMPLModel.forward return tuple,
#          use_point_displacement=True / use_point_color=True path)
# --------------------------------------------------------------------------
def smpl_forward(params, body_pose, global_orient, transl, time):
    del time  # unused in the point-color / point-displacement path
    P = params["num_players"]
    V = params["V"]
    Jp = params["Jp"]
    full_body_pose = jnp.concatenate([global_orient[:, None, :], body_pose], axis=1)

    shs = jnp.concatenate([params["shs_dc"], params["shs_rest"]], axis=1)   # [n,1,3]

    # Displaced rest vertices; verts2uv_idx is the identity arange -> plain slice.
    v_displaced = (params["v_template"] + params["displacements"])[:, :V, :]
    v_t = jnp.swapaxes(v_displaced, 1, 2).reshape(P * 3, V)                 # [P*3, V]

    # Joint transforms (tiny), flat 4x4 per joint, transl folded into A.
    A = lbs_rel_transforms(full_body_pose, params["J"], params["parents"])
    A_t = build_pose_matrix(A, transl, Jp)                                  # [P*16, Jp]

    # ONE fused Pallas call: LBS blend + affine apply + activations.
    T_slab, pv_slab, act_slab = lbs_act_fused_pallas(
        A_t, params["W_t"], v_t, params["act_in"], num_players=P)

    verts_posed = jnp.swapaxes(pv_slab.reshape(P, 3, V), 1, 2).reshape(P * V, 3)
    # Per-vertex transforms include the global transl (as in the reference lbs()).
    transforms = jnp.swapaxes(
        T_slab.reshape(P, 16, V)[:, :12], 1, 2).reshape(P * V, 3, 4)

    opa = act_slab[0:1].T                                                   # [V,1]
    sca = act_slab[1:4].T                                                   # [V,3]
    rot = act_slab[4:8].T                                                   # [V,4]

    verts_normal = compute_vertex_normals(
        verts_posed, params["D1"], params["D2"], params["incidence"])

    return (verts_posed, opa, sca, rot, shs, transforms, verts_posed, verts_normal)


if __name__ == "__main__":
    key = jax.random.PRNGKey(0)
    P = 1          # num_players
    V = 384        # base vertices (multiple of 128 for lane-dense tiles)
    num_repeat = 2
    NJ = 24        # SMPL joints
    F = 512        # faces
    max_freq = 4

    params = init_params(key, num_players=P, V=V, num_repeat=num_repeat, NJ=NJ, F=F)

    k1, k2, k3 = jax.random.split(jax.random.PRNGKey(1), 3)
    body_pose = 0.1 * jax.random.normal(k1, (P, NJ - 1, 3), jnp.float32)
    global_orient = 0.1 * jax.random.normal(k2, (P, 3), jnp.float32)
    transl = 0.1 * jax.random.normal(k3, (P, 3), jnp.float32)
    time = jnp.linspace(0.0, 1.0, max_freq * 2 + 1)

    fwd = jax.jit(lambda bp, go, tr, tt: smpl_forward(params, bp, go, tr, tt))
    outs = fwd(body_pose, global_orient, transl, time)
    jax.block_until_ready(outs)

    # light sanity checks
    assert outs[0].shape == (P * V, 3)
    assert outs[1].shape == (V, 1) and outs[2].shape == (V, 3)
    assert outs[3].shape == (V, 4) and outs[5].shape == (P * V, 3, 4)
    assert outs[6].shape == (P * V, 3) and outs[7].shape == (P * V, 3)
    assert all(bool(jnp.all(jnp.isfinite(o))) for o in
               (outs[0], outs[1], outs[2], outs[3], outs[5], outs[7]))
    print("KERNEL_OK")
</pallas_src>

<mosaic_0001>
module attributes {stable_mosaic.version = 11 : i64} {
  func.func @kernel(%arg0: i32, %arg1: memref<16x32xf32, #tpu.memory_space<vmem>>, %arg2: memref<32x384xf32, #tpu.memory_space<vmem>>, %arg3: memref<3x384xf32, #tpu.memory_space<vmem>>, %arg4: memref<8x384xf32, #tpu.memory_space<vmem>>, %arg5: memref<16x384xf32, #tpu.memory_space<vmem>>, %arg6: memref<3x384xf32, #tpu.memory_space<vmem>>, %arg7: memref<8x384xf32, #tpu.memory_space<vmem>>) attributes {dimension_semantics = [#tpu.dimension_semantics<parallel>], iteration_bounds = array<i64: 1>, scalar_prefetch = 0 : i64, scratch_operands = 0 : i64, tpu.core_type = #tpu.core_type<tc>, window_params = [{pipeline_mode = #tpu.pipeline_mode<synchronous>, transform_indices = @transform_0, window_bounds = array<i64: 16, 32>}, {transform_indices = @transform_1, window_bounds = array<i64: 32, 384>}, {transform_indices = @transform_2, window_bounds = array<i64: 3, 384>}, {transform_indices = @transform_3, window_bounds = array<i64: 8, 384>}, {transform_indices = @transform_4, window_bounds = array<i64: 16, 384>}, {transform_indices = @transform_5, window_bounds = array<i64: 3, 384>}, {transform_indices = @transform_6, window_bounds = array<i64: 8, 384>}]} {
    %c0 = arith.constant 0 : index
    %c0_0 = arith.constant 0 : index
    %0 = vector.load %arg1[%c0, %c0_0] : memref<16x32xf32, #tpu.memory_space<vmem>>, vector<16x32xf32>
    %c0_1 = arith.constant 0 : index
    %c0_2 = arith.constant 0 : index
    %1 = vector.load %arg2[%c0_1, %c0_2] : memref<32x384xf32, #tpu.memory_space<vmem>>, vector<32x384xf32>
    %cst = arith.constant dense<0.000000e+00> : vector<16x384xf32>
    %2 = tpu.matmul %0, %1, %cst {dimension_numbers = #tpu.dot_dimension_numbers<[1], [0], [0], [1], [0, 0, 1, 1], [], []>} : vector<16x32xf32>, vector<32x384xf32>, vector<16x384xf32> -> vector<16x384xf32>
    %c0_3 = arith.constant 0 : index
    %c0_4 = arith.constant 0 : index
    %3 = vector.load %arg5[%c0_3, %c0_4] : memref<16x384xf32, #tpu.memory_space<vmem>>, vector<16x384xf32>
    tpu.vector_store %arg5[%c0_3, %c0_4], %2 {strides = array<i32>} : memref<16x384xf32, #tpu.memory_space<vmem>>, vector<16x384xf32>,
    %c0_5 = arith.constant 0 : index
    %c0_6 = arith.constant 0 : index
    %4 = vector.load %arg3[%c0_5, %c0_6] : memref<3x384xf32, #tpu.memory_space<vmem>>, vector<3x384xf32>
    %5 = vector.extract_strided_slice %4 {offsets = [0, 0], sizes = [1, 384], strides = [1, 1]} : vector<3x384xf32> to vector<1x384xf32>
    %6 = vector.extract_strided_slice %4 {offsets = [1, 0], sizes = [1, 384], strides = [1, 1]} : vector<3x384xf32> to vector<1x384xf32>
    %7 = vector.extract_strided_slice %4 {offsets = [2, 0], sizes = [1, 384], strides = [1, 1]} : vector<3x384xf32> to vector<1x384xf32>
    %8 = vector.extract_strided_slice %2 {offsets = [0, 0], sizes = [1, 384], strides = [1, 1]} : vector<16x384xf32> to vector<1x384xf32>
    %9 = arith.mulf %8, %5 : vector<1x384xf32>
    %10 = vector.extract_strided_slice %2 {offsets = [1, 0], sizes = [1, 384], strides = [1, 1]} : vector<16x384xf32> to vector<1x384xf32>
    %11 = arith.mulf %10, %6 : vector<1x384xf32>
    %12 = arith.addf %9, %11 : vector<1x384xf32>
    %13 = vector.extract_strided_slice %2 {offsets = [2, 0], sizes = [1, 384], strides = [1, 1]} : vector<16x384xf32> to vector<1x384xf32>
    %14 = arith.mulf %13, %7 : vector<1x384xf32>
    %15 = arith.addf %12, %14 : vector<1x384xf32>
    %16 = vector.extract_strided_slice %2 {offsets = [3, 0], sizes = [1, 384], strides = [1, 1]} : vector<16x384xf32> to vector<1x384xf32>
    %17 = arith.addf %15, %16 : vector<1x384xf32>
    %18 = vector.extract_strided_slice %2 {offsets = [4, 0], sizes = [1, 384], strides = [1, 1]} : vector<16x384xf32> to vector<1x384xf32>
    %19 = arith.mulf %18, %5 : vector<1x384xf32>
    %20 = vector.extract_strided_slice %2 {offsets = [5, 0], sizes = [1, 384], strides = [1, 1]} : vector<16x384xf32> to vector<1x384xf32>
    %21 = arith.mulf %20, %6 : vector<1x384xf32>
    %22 = arith.addf %19, %21 : vector<1x384xf32>
    %23 = vector.extract_strided_slice %2 {offsets = [6, 0], sizes = [1, 384], strides = [1, 1]} : vector<16x384xf32> to vector<1x384xf32>
    %24 = arith.mulf %23, %7 : vector<1x384xf32>
    %25 = arith.addf %22, %24 : vector<1x384xf32>
    %26 = vector.extract_strided_slice %2 {offsets = [7, 0], sizes = [1, 384], strides = [1, 1]} : vector<16x384xf32> to vector<1x384xf32>
    %27 = arith.addf %25, %26 : vector<1x384xf32>
    %28 = vector.extract_strided_slice %2 {offsets = [8, 0], sizes = [1, 384], strides = [1, 1]} : vector<16x384xf32> to vector<1x384xf32>
    %29 = arith.mulf %28, %5 : vector<1x384xf32>
    %30 = vector.extract_strided_slice %2 {offsets = [9, 0], sizes = [1, 384], strides = [1, 1]} : vector<16x384xf32> to vector<1x384xf32>
    %31 = arith.mulf %30, %6 : vector<1x384xf32>
    %32 = arith.addf %29, %31 : vector<1x384xf32>
    %33 = vector.extract_strided_slice %2 {offsets = [10, 0], sizes = [1, 384], strides = [1, 1]} : vector<16x384xf32> to vector<1x384xf32>
    %34 = arith.mulf %33, %7 : vector<1x384xf32>
    %35 = arith.addf %32, %34 : vector<1x384xf32>
    %36 = vector.extract_strided_slice %2 {offsets = [11, 0], sizes = [1, 384], strides = [1, 1]} : vector<16x384xf32> to vector<1x384xf32>
    %37 = arith.addf %35, %36 : vector<1x384xf32>
    %38 = tpu.concatenate %17, %27, %37 in 0 : vector<1x384xf32>, vector<1x384xf32>, vector<1x384xf32> -> vector<3x384xf32>
    %c0_7 = arith.constant 0 : index
    %c0_8 = arith.constant 0 : index
    %39 = vector.load %arg6[%c0_7, %c0_8] : memref<3x384xf32, #tpu.memory_space<vmem>>, vector<3x384xf32>
    tpu.vector_store %arg6[%c0_7, %c0_8], %38 {strides = array<i32>} : memref<3x384xf32, #tpu.memory_space<vmem>>, vector<3x384xf32>,
    %c0_9 = arith.constant 0 : index
    %c0_10 = arith.constant 0 : index
    %40 = vector.load %arg4[%c0_9, %c0_10] : memref<8x384xf32, #tpu.memory_space<vmem>>, vector<8x384xf32>
    %41 = vector.extract_strided_slice %40 {offsets = [0, 0], sizes = [1, 384], strides = [1, 1]} : vector<8x384xf32> to vector<1x384xf32>
    %42 = arith.negf %41 : vector<1x384xf32>
    %43 = math.exp %42 : vector<1x384xf32>
    %cst_11 = arith.constant 1.000000e+00 : f32
    %44 = vector.broadcast %cst_11 : f32 to vector<1x384xf32>
    %45 = arith.addf %44, %43 : vector<1x384xf32>
    %46 = arith.divf %44, %45 : vector<1x384xf32>
    %47 = vector.extract_strided_slice %40 {offsets = [1, 0], sizes = [3, 384], strides = [1, 1]} : vector<8x384xf32> to vector<3x384xf32>
    %48 = math.exp %47 : vector<3x384xf32>
    %49 = vector.extract_strided_slice %40 {offsets = [4, 0], sizes = [4, 384], strides = [1, 1]} : vector<8x384xf32> to vector<4x384xf32>
    %50 = vector.extract_strided_slice %49 {offsets = [0, 0], sizes = [1, 384], strides = [1, 1]} : vector<4x384xf32> to vector<1x384xf32>
    %51 = vector.extract_strided_slice %49 {offsets = [0, 0], sizes = [1, 384], strides = [1, 1]} : vector<4x384xf32> to vector<1x384xf32>
    %52 = arith.mulf %50, %51 : vector<1x384xf32>
    %53 = vector.extract_strided_slice %49 {offsets = [1, 0], sizes = [1, 384], strides = [1, 1]} : vector<4x384xf32> to vector<1x384xf32>
    %54 = vector.extract_strided_slice %49 {offsets = [1, 0], sizes = [1, 384], strides = [1, 1]} : vector<4x384xf32> to vector<1x384xf32>
    %55 = arith.mulf %53, %54 : vector<1x384xf32>
    %56 = arith.addf %52, %55 : vector<1x384xf32>
    %57 = vector.extract_strided_slice %49 {offsets = [2, 0], sizes = [1, 384], strides = [1, 1]} : vector<4x384xf32> to vector<1x384xf32>
    %58 = vector.extract_strided_slice %49 {offsets = [2, 0], sizes = [1, 384], strides = [1, 1]} : vector<4x384xf32> to vector<1x384xf32>
    %59 = arith.mulf %57, %58 : vector<1x384xf32>
    %60 = arith.addf %56, %59 : vector<1x384xf32>
    %61 = vector.extract_strided_slice %49 {offsets = [3, 0], sizes = [1, 384], strides = [1, 1]} : vector<4x384xf32> to vector<1x384xf32>
    %62 = vector.extract_strided_slice %49 {offsets = [3, 0], sizes = [1, 384], strides = [1, 1]} : vector<4x384xf32> to vector<1x384xf32>
    %63 = arith.mulf %61, %62 : vector<1x384xf32>
    %64 = arith.addf %60, %63 : vector<1x384xf32>
    %cst_12 = arith.constant 1.000000e-24 : f32
    %65 = vector.broadcast %cst_12 : f32 to vector<1x384xf32>
    %66 = arith.maximumf %64, %65 : vector<1x384xf32>
    %67 = math.rsqrt %66 : vector<1x384xf32>
    %68 = vector.broadcast %67 : vector<1x384xf32> to vector<4x384xf32>
    %69 = arith.mulf %49, %68 : vector<4x384xf32>
    %70 = tpu.concatenate %46, %48, %69 in 0 : vector<1x384xf32>, vector<3x384xf32>, vector<4x384xf32> -> vector<8x384xf32>
    %c0_13 = arith.constant 0 : index
    %c0_14 = arith.constant 0 : index
    %71 = vector.load %arg7[%c0_13, %c0_14] : memref<8x384xf32, #tpu.memory_space<vmem>>, vector<8x384xf32>
    tpu.vector_store %arg7[%c0_13, %c0_14], %70 {strides = array<i32>} : memref<8x384xf32, #tpu.memory_space<vmem>>, vector<8x384xf32>,
    return
  }
  func.func @transform_0(%arg0: i32) -> (i32, i32) {
    %c0_i32 = arith.constant 0 : i32
    %c0_i32_0 = arith.constant 0 : i32
    %c0_i32_1 = arith.constant 0 : i32
    return %c0_i32, %c0_i32_0 : i32, i32
  }
  func.func @transform_1(%arg0: i32) -> (i32, i32) {
    %c0_i32 = arith.constant 0 : i32
    %c0_i32_0 = arith.constant 0 : i32
    return %c0_i32, %arg0 : i32, i32
  }
  func.func @transform_2(%arg0: i32) -> (i32, i32) {
    %c0_i32 = arith.constant 0 : i32
    %c0_i32_0 = arith.constant 0 : i32
    return %c0_i32, %arg0 : i32, i32
  }
  func.func @transform_3(%arg0: i32) -> (i32, i32) {
    %c0_i32 = arith.constant 0 : i32
    %c0_i32_0 = arith.constant 0 : i32
    return %c0_i32, %arg0 : i32, i32
  }
  func.func @transform_4(%arg0: i32) -> (i32, i32) {
    %c0_i32 = arith.constant 0 : i32
    %c0_i32_0 = arith.constant 0 : i32
    return %c0_i32, %arg0 : i32, i32
  }
  func.func @transform_5(%arg0: i32) -> (i32, i32) {
    %c0_i32 = arith.constant 0 : i32
    %c0_i32_0 = arith.constant 0 : i32
    return %c0_i32, %arg0 : i32, i32
  }
  func.func @transform_6(%arg0: i32) -> (i32, i32) {
    %c0_i32 = arith.constant 0 : i32
    %c0_i32_0 = arith.constant 0 : i32
    return %c0_i32, %arg0 : i32, i32
  }
}

</mosaic_0001>

<llo_original>
// kernel: _lambda_.1
$region0: #{_lambda_.1}
  #allocation0 [shape = 'u32[]', space=smem, size = 0x4, offset = 0x4, fixed_abs, tag = 'smem constant byte address 0x4 - core index']
  #allocation1 [shape = 'u32[144,128]{1,0:T(1,128)}', space=vmem, size = 0x12000, scoped, tag = 'internal scratch']
  %s0 = inlined_call_operand.vmem [shape: f32[16,32], index: 0, kind: input, shape index: {}]
  %s1 = inlined_call_operand.vmem [shape: f32[32,384], index: 1, kind: input, shape index: {}]
  %s2 = inlined_call_operand.vmem [shape: f32[3,384], index: 2, kind: input, shape index: {}]
  %s3 = inlined_call_operand.vmem [shape: f32[8,384], index: 3, kind: input, shape index: {}]
  %s4 = inlined_call_operand.vmem [shape: f32[16,384], index: 4, kind: output, shape index: {0}]
  %s5 = inlined_call_operand.vmem [shape: f32[3,384], index: 5, kind: output, shape index: {1}]
  %s6 = inlined_call_operand.vmem [shape: f32[8,384], index: 6, kind: output, shape index: {2}]
  %7 = xla_tuple %s4, %s5, %s6
  %s8 = sld [smem:[#allocation0]]
  $region42: #{_lambda_.1} parent=0
    _
  %s10 = ssub.s32 1, %s8
  %s11 = scalar_select 0, %s10, %s8
  // Predicated region
  $region2: #{_lambda_.1} parent=0 // pred_check
    _
  $region3: #{_lambda_.1} parent=0 // pred_check_branch
    %13 = sbr.rel (0) target = $region5
  $region4: #{_lambda_.1} parent=0 // pred_region
    _
  $region5: #{_lambda_.1} parent=0 // pred_fallthru
    _
  // Predicated region
  $region6: #{_lambda_.1} parent=0 // pred_check
    _
  $region7: #{_lambda_.1} parent=0 // pred_check_branch
    %15 = sbr.rel (0) target = $region9
  $region8: #{_lambda_.1} parent=0 // pred_region
    _
  $region9: #{_lambda_.1} parent=0 // pred_fallthru
    _
  // Predicated region
  $region10: #{_lambda_.1} parent=0 // pred_check
    _
  $region11: #{_lambda_.1} parent=0 // pred_check_branch
    %17 = sbr.rel (0) target = $region13
  $region12: #{_lambda_.1} parent=0 // pred_region
    _
  $region13: #{_lambda_.1} parent=0 // pred_fallthru
    _
  // Predicated region
  $region14: #{_lambda_.1} parent=0 // pred_check
    _
  $region15: #{_lambda_.1} parent=0 // pred_check_branch
    %19 = sbr.rel (0) target = $region17
  $region16: #{_lambda_.1} parent=0 // pred_region
    _
  $region17: #{_lambda_.1} parent=0 // pred_fallthru
    _
  %v20 = vld [vmem:[%s0] sm:$0xff]
  %v21 = vld [vmem:[%s0 + $0x8] sm:$0xff]
  %v22 = vld [vmem:[%s1] sm:$0xff]
  %v23 = vld [vmem:[%s1 + $0x8] sm:$0xff]
  %v24 = vld [vmem:[%s1 + $0x10] sm:$0xff]
  %v25 = vld [vmem:[%s1 + $0x18] sm:$0xff]
  %v26 = vld [vmem:[%s1 + $0x20] sm:$0xff]
  %v27 = vld [vmem:[%s1 + $0x28] sm:$0xff]
  %v28 = vld [vmem:[%s1 + $0x30] sm:$0xff]
  %v29 = vld [vmem:[%s1 + $0x38] sm:$0xff]
  %v30 = vld [vmem:[%s1 + $0x40] sm:$0xff]
  %v31 = vld [vmem:[%s1 + $0x48] sm:$0xff]
  %v32 = vld [vmem:[%s1 + $0x50] sm:$0xff]
  %v33 = vld [vmem:[%s1 + $0x58] sm:$0xff]
  %vm34 = vcmask 261120
  %v36 = vsel %vm34, %v20, 0
  %v39 = vsel %vm34, %v21, 0
  %41 = vmatprep.subr.mxu0 0.0
  %42 = vmatpush1.msra.mxu0 0.0
  %43 = vmatprep.subr.mxu0 0.0
  %44 = vmatpush1.msra.mxu0 0.0
  %45 = vmatprep.subr.mxu0 0.0
  %46 = vmatpush1.msra.mxu0 0.0
  %47 = vmatprep.subr.mxu0 0.0
  %48 = vmatpush1.msra.mxu0 0.0
  %49 = vmatprep.subr.mxu0 0.0
  %50 = vmatpush1.msra.mxu0 0.0
  %51 = vmatprep.subr.mxu0 0.0
  %52 = vmatpush1.msra.mxu0 0.0
  %53 = vmatprep.subr.mxu0 0.0
  %54 = vmatpush1.msra.mxu0 0.0
  %55 = vmatprep.subr.mxu0 0.0
  %56 = vmatpush1.msra.mxu0 0.0
  %57 = vmatprep.subr.mxu0 0.0
  %58 = vmatpush1.msra.mxu0 0.0
  %59 = vmatprep.subr.mxu0 0.0
  %60 = vmatpush1.msra.mxu0 0.0
  %61 = vmatprep.subr.mxu0 0.0
  %62 = vmatpush1.msra.mxu0 0.0
  %63 = vmatprep.subr.mxu0 0.0
  %64 = vmatpush1.msra.mxu0 0.0
  %65 = vmatprep.subr.mxu0 %v32
  %66 = vmatpush1.msra.mxu0 %v31
  %67 = vmatprep.subr.mxu0 %v29
  %68 = vmatpush1.msra.mxu0 %v28
  %69 = vmatprep.subr.mxu0 %v26
  %70 = vmatpush1.msra.mxu0 %v25
  %71 = vmatprep.subr.mxu0 %v23
  %72 = vmatpush1.msra.mxu0 %v22
  %73 = vmatprep.subr.mxu0 0.0
  %74 = vmatpush2.msra.mxu0 0.0
  %75 = vmatprep.subr.mxu0 0.0
  %76 = vmatpush2.msra.mxu0 0.0
  %77 = vmatprep.subr.mxu0 0.0
  %78 = vmatpush2.msra.mxu0 0.0
  %79 = vmatprep.subr.mxu0 0.0
  %80 = vmatpush2.msra.mxu0 0.0
  %81 = vmatprep.subr.mxu0 0.0
  %82 = vmatpush2.msra.mxu0 0.0
  %83 = vmatprep.subr.mxu0 0.0
  %84 = vmatpush2.msra.mxu0 0.0
  %85 = vmatprep.subr.mxu0 0.0
  %86 = vmatpush2.msra.mxu0 0.0
  %87 = vmatprep.subr.mxu0 0.0
  %88 = vmatpush2.msra.mxu0 0.0
  %89 = vmatprep.subr.mxu0 0.0
  %90 = vmatpush2.msra.mxu0 0.0
  %91 = vmatprep.subr.mxu0 0.0
  %92 = vmatpush2.msra.mxu0 0.0
  %93 = vmatprep.subr.mxu0 0.0
  %94 = vmatpush2.msra.mxu0 0.0
  %95 = vmatprep.subr.mxu0 0.0
  %96 = vmatpush2.msra.mxu0 0.0
  %97 = vmatprep.subr.mxu0 0.0
  %98 = vmatpush2.msra.mxu0 0.0
  %99 = vmatprep.subr.mxu0 0.0
  %100 = vmatpush2.msra.mxu0 0.0
  %101 = vmatprep.subr.mxu0 0.0
  %102 = vmatpush2.msra.mxu0 0.0
  %103 = vmatprep.subr.mxu0 0.0
  %104 = vmatpush2.msra.mxu0 0.0
  %105 = vmatprep.mubr.f32.mxu0 0.0
  %106 = vmatmul.mubr.f32.gmra.mxu0 %v36
  %v107 = vpop.f32.mrf.mxu0
  %v108 = vadd.f32 0.0, %v107
  %v109 = vpop.f32.mrf.mxu0
  %v110 = vadd.f32 0.0, %v109
  %111 = vmatprep.mubr.f32.mxu0 0.0
  %112 = vmatmul.mubr.f32.gmra.mxu0 %v39
  %v113 = vpop.f32.mrf.mxu0
  %v114 = vadd.f32 0.0, %v113
  %v115 = vpop.f32.mrf.mxu0
  %v116 = vadd.f32 0.0, %v115
  %117 = vdwg.mxu0
  %118 = vmatprep.subr.mxu0 0.0
  %119 = vmatpush1.msra.mxu0 0.0
  %120 = vmatprep.subr.mxu0 0.0
  %121 = vmatpush1.msra.mxu0 0.0
  %122 = vmatprep.subr.mxu0 0.0
  %123 = vmatpush1.msra.mxu0 0.0
  %124 = vmatprep.subr.mxu0 0.0
  %125 = vmatpush1.msra.mxu0 0.0
  %126 = vmatprep.subr.mxu0 0.0
  %127 = vmatpush1.msra.mxu0 0.0
  %128 = vmatprep.subr.mxu0 0.0
  %129 = vmatpush1.msra.mxu0 0.0
  %130 = vmatprep.subr.mxu0 0.0
  %131 = vmatpush1.msra.mxu0 0.0
  %132 = vmatprep.subr.mxu0 0.0
  %133 = vmatpush1.msra.mxu0 0.0
  %134 = vmatprep.subr.mxu0 0.0
  %135 = vmatpush1.msra.mxu0 0.0
  %136 = vmatprep.subr.mxu0 0.0
  %137 = vmatpush1.msra.mxu0 0.0
  %138 = vmatprep.subr.mxu0 0.0
  %139 = vmatpush1.msra.mxu0 0.0
  %140 = vmatprep.subr.mxu0 0.0
  %141 = vmatpush1.msra.mxu0 0.0
  %142 = vmatprep.subr.mxu0 0.0
  %143 = vmatpush1.msra.mxu0 %v33
  %144 = vmatprep.subr.mxu0 0.0
  %145 = vmatpush1.msra.mxu0 %v30
  %146 = vmatprep.subr.mxu0 0.0
  %147 = vmatpush1.msra.mxu0 %v27
  %148 = vmatprep.subr.mxu0 0.0
  %149 = vmatpush1.msra.mxu0 %v24
  %150 = vmatprep.subr.mxu0 0.0
  %151 = vmatpush2.msra.mxu0 0.0
  %152 = vmatprep.subr.mxu0 0.0
  %153 = vmatpush2.msra.mxu0 0.0
  %154 = vmatprep.subr.mxu0 0.0
  %155 = vmatpush2.msra.mxu0 0.0
  %156 = vmatprep.subr.mxu0 0.0
  %157 = vmatpush2.msra.mxu0 0.0
  %158 = vmatprep.subr.mxu0 0.0
  %159 = vmatpush2.msra.mxu0 0.0
  %160 = vmatprep.subr.mxu0 0.0
  %161 = vmatpush2.msra.mxu0 0.0
  %162 = vmatprep.subr.mxu0 0.0
  %163 = vmatpush2.msra.mxu0 0.0
  %164 = vmatprep.subr.mxu0 0.0
  %165 = vmatpush2.msra.mxu0 0.0
  %166 = vmatprep.subr.mxu0 0.0
  %167 = vmatpush2.msra.mxu0 0.0
  %168 = vmatprep.subr.mxu0 0.0
  %169 = vmatpush2.msra.mxu0 0.0
  %170 = vmatprep.subr.mxu0 0.0
  %171 = vmatpush2.msra.mxu0 0.0
  %172 = vmatprep.subr.mxu0 0.0
  %173 = vmatpush2.msra.mxu0 0.0
  %174 = vmatprep.subr.mxu0 0.0
  %175 = vmatpush2.msra.mxu0 0.0
  %176 = vmatprep.subr.mxu0 0.0
  %177 = vmatpush2.msra.mxu0 0.0
  %178 = vmatprep.subr.mxu0 0.0
  %179 = vmatpush2.msra.mxu0 0.0
  %180 = vmatprep.subr.mxu0 0.0
  %181 = vmatpush2.msra.mxu0 0.0
  %182 = vmatprep.mubr.f32.mxu0 0.0
  %183 = vmatmul.mubr.f32.gmra.mxu0 %v36
  %v184 = vpop.f32.mrf.mxu0
  %v185 = vadd.f32 0.0, %v184
  %v186 = vpop.f32.mrf.mxu0
  %187 = vmatprep.mubr.f32.mxu0 0.0
  %188 = vmatmul.mubr.f32.gmra.mxu0 %v39
  %v189 = vpop.f32.mrf.mxu0
  %v190 = vadd.f32 0.0, %v189
  %v191 = vpop.f32.mrf.mxu0
  %192 = vdwg.mxu0
  %193 = vst [vmem:[%s4] sm:$0xff] %v108
  %194 = vst [vmem:[%s4 + $0x8] sm:$0xff] %v110
  %195 = vst [vmem:[%s4 + $0x10] sm:$0xff] %v185
  %196 = vst [vmem:[%s4 + $0x18] sm:$0xff] %v114
  %197 = vst [vmem:[%s4 + $0x20] sm:$0xff] %v116
  %198 = vst [vmem:[%s4 + $0x28] sm:$0xff] %v190
  %v199 = vld [vmem:[%s2] sm:$0x77]
  %v200 = vld [vmem:[%s2 + $0x8] sm:$0x7]
  %v203 = vlaneseq
  %v204 = vshrl.u32 %v203, 7
  %v205 = vsub.s32 0, %v204
  %v206 = vrot.slane %v199, %v205
  %v207 = vlaneseq
  %v208 = vshrl.u32 %v207, 7
  %v209 = vsub.s32 4, %v208
  %v210 = vrot.slane %v199, %v209
  %v211 = vlaneseq
  %v212 = vshrl.u32 %v211, 7
  %v213 = vsub.s32 0, %v212
  %v214 = vrot.slane %v200, %v213
  %v218 = vmul.f32 %v108, %v206
  %v219 = vmul.f32 %v110, %v210
  %v220 = vmul.f32 %v185, %v214
  %v221 = vlaneseq
  %v222 = vshrl.u32 %v221, 7
  %v223 = vsub.s32 1, %v222
  %v224 = vrot.slane %v199, %v223
  %v225 = vlaneseq
  %v226 = vshrl.u32 %v225, 7
  %v227 = vsub.s32 5, %v226
  %v228 = vrot.slane %v199, %v227
  %v229 = vlaneseq
  %v230 = vshrl.u32 %v229, 7
  %v231 = vsub.s32 1, %v230
  %v232 = vrot.slane %v200, %v231
  %v236 = vmul.f32 %v108, %v224
  %v237 = vmul.f32 %v110, %v228
  %v238 = vmul.f32 %v185, %v232
  %v242 = vrot.slane %v236, 1
  %v243 = vrot.slane %v237, 1
  %v244 = vrot.slane %v238, 1
  %v248 = vadd.f32 %v218, %v242
  %v249 = vadd.f32 %v219, %v243
  %v250 = vadd.f32 %v220, %v244
  %v251 = vlaneseq
  %v252 = vshrl.u32 %v251, 7
  %v253 = vsub.s32 2, %v252
  %v254 = vrot.slane %v199, %v253
  %v255 = vlaneseq
  %v256 = vshrl.u32 %v255, 7
  %v257 = vsub.s32 6, %v256
  %v258 = vrot.slane %v199, %v257
  %v259 = vlaneseq
  %v260 = vshrl.u32 %v259, 7
  %v261 = vsub.s32 2, %v260
  %v262 = vrot.slane %v200, %v261
  %v266 = vmul.f32 %v108, %v254
  %v267 = vmul.f32 %v110, %v258
  %v268 = vmul.f32 %v185, %v262
  %v272 = vrot.slane %v266, 2
  %v273 = vrot.slane %v267, 2
  %v274 = vrot.slane %v268, 2
  %v278 = vadd.f32 %v248, %v272
  %v279 = vadd.f32 %v249, %v273
  %v280 = vadd.f32 %v250, %v274
  %v284 = vrot.slane %v108, 3
  %v285 = vrot.slane %v110, 3
  %v286 = vrot.slane %v185, 3
  %v290 = vadd.f32 %v278, %v284
  %v291 = vadd.f32 %v279, %v285
  %v292 = vadd.f32 %v280, %v286
  %v293 = vmul.f32 %v114, %v206
  %v294 = vmul.f32 %v116, %v210
  %v295 = vmul.f32 %v190, %v214
  %v296 = vmul.f32 %v114, %v224
  %v297 = vmul.f32 %v116, %v228
  %v298 = vmul.f32 %v190, %v232
  %v302 = vrot.slane %v296, 1
  %v303 = vrot.slane %v297, 1
  %v304 = vrot.slane %v298, 1
  %v308 = vadd.f32 %v293, %v302
  %v309 = vadd.f32 %v294, %v303
  %v310 = vadd.f32 %v295, %v304
  %v311 = vmul.f32 %v114, %v254
  %v312 = vmul.f32 %v116, %v258
  %v313 = vmul.f32 %v190, %v262
  %v317 = vrot.slane %v311, 2
  %v318 = vrot.slane %v312, 2
  %v319 = vrot.slane %v313, 2
  %v323 = vadd.f32 %v308, %v317
  %v324 = vadd.f32 %v309, %v318
  %v325 = vadd.f32 %v310, %v319
  %v329 = vrot.slane %v114, 3
  %v330 = vrot.slane %v116, 3
  %v331 = vrot.slane %v190, 3
  %v335 = vadd.f32 %v323, %v329
  %v336 = vadd.f32 %v324, %v330
  %v337 = vadd.f32 %v325, %v331
  %v341 = vrot.slane %v290, 3
  %v342 = vrot.slane %v291, 3
  %v343 = vrot.slane %v292, 3
  %v350 = vrot.slane %v335, 6
  %v351 = vrot.slane %v336, 6
  %v352 = vrot.slane %v337, 6
  %vm356 = vcmask 1040384
  %v357 = vsel %vm356, %v290, %v341
  %v358 = vsel %vm356, %v291, %v342
  %v359 = vsel %vm356, %v292, %v343
  %vm360 = vcmask 1041408
  %v361 = vsel %vm360, %v357, %v350
  %v362 = vsel %vm360, %v358, %v351
  %v363 = vsel %vm360, %v359, %v352
  %v366 = vcombine.low %v361, %v362
  %368 = vst [vmem:[%s5] sm:$0x77] %v366
  %369 = vst [vmem:[%s5 + $0x8] sm:$0x7] %v363
  %v370 = vld [vmem:[%s3] sm:$0xff]
  %v371 = vld [vmem:[%s3 + $0x8] sm:$0xff]
  %v372 = vld [vmem:[%s3 + $0x10] sm:$0xff]
  %v373 = vxor.u32 %v370, 2147483648
  %v374 = vxor.u32 %v371, 2147483648
  %v375 = vxor.u32 %v372, 2147483648
  %v376 = vmul.f32 %v373, 1.442695
  %v377 = vpow.pop %v376
  %v378 = vmul.f32 %v374, 1.442695
  %v379 = vpow.pop %v378
  %v380 = vmul.f32 %v375, 1.442695
  %v381 = vpow.pop %v380
  %v382 = vadd.f32 %v377, 1.0
  %v383 = vadd.f32 %v379, 1.0
  %v384 = vadd.f32 %v381, 1.0
  %v385 = vrcp.pop %v382
  %v386 = vmul.f32 1.0, %v385
  %v387 = vrcp.pop %v383
  %v388 = vmul.f32 1.0, %v387
  %v389 = vrcp.pop %v384
  %v390 = vmul.f32 1.0, %v389
  %v391 = vmul.f32 %v370, 1.442695
  %v392 = vpow.pop %v391
  %v393 = vmul.f32 %v371, 1.442695
  %v394 = vpow.pop %v393
  %v395 = vmul.f32 %v372, 1.442695
  %v396 = vpow.pop %v395
  %v397 = vmul.f32 %v370, %v370
  %v398 = vmul.f32 %v371, %v371
  %v399 = vmul.f32 %v372, %v372
  %v403 = vrot.slane %v397, 1
  %v404 = vrot.slane %v398, 1
  %v405 = vrot.slane %v399, 1
  %v409 = vadd.f32 %v397, %v403
  %v410 = vadd.f32 %v398, %v404
  %v411 = vadd.f32 %v399, %v405
  %v412 = vrot.slane %v397, 2
  %v413 = vrot.slane %v398, 2
  %v414 = vrot.slane %v399, 2
  %v418 = vadd.f32 %v409, %v412
  %v419 = vadd.f32 %v410, %v413
  %v420 = vadd.f32 %v411, %v414
  %v421 = vrot.slane %v397, 3
  %v422 = vrot.slane %v398, 3
  %v423 = vrot.slane %v399, 3
  %v427 = vadd.f32 %v418, %v421
  %v428 = vadd.f32 %v419, %v422
  %v429 = vadd.f32 %v420, %v423
  %v430 = vmax.f32 %v427, 1e-24
  %v431 = vmax.f32 %v428, 1e-24
  %v432 = vmax.f32 %v429, 1e-24
  %v433 = vrsqrt.pop %v430
  %v434 = vrsqrt.pop %v431
  %v435 = vrsqrt.pop %v432
  %v436 = vlaneseq
  %v437 = vshrl.u32 %v436, 7
  %v438 = vsub.s32 4, %v437
  %v439 = vrot.slane %v433, %v438
  %v440 = vlaneseq
  %v441 = vshrl.u32 %v440, 7
  %v442 = vsub.s32 4, %v441
  %v443 = vrot.slane %v434, %v442
  %v444 = vlaneseq
  %v445 = vshrl.u32 %v444, 7
  %v446 = vsub.s32 4, %v445
  %v447 = vrot.slane %v435, %v446
  %v448 = vmul.f32 %v370, %v439
  %v449 = vmul.f32 %v371, %v443
  %v450 = vmul.f32 %v372, %v447
  %v451 = vsel %vm356, %v386, %v392
  %v452 = vsel %vm356, %v388, %v394
  %v453 = vsel %vm356, %v390, %v396
  %vm454 = vcmask 1043456
  %v455 = vsel %vm454, %v451, %v448
  %v456 = vsel %vm454, %v452, %v449
  %v457 = vsel %vm454, %v453, %v450
  %458 = vst [vmem:[%s6] sm:$0xff] %v455
  %459 = vst [vmem:[%s6 + $0x8] sm:$0xff] %v456
  %460 = vst [vmem:[%s6 + $0x10] sm:$0xff] %v457
  // Predicated region
  $region18: #{_lambda_.1} parent=0 // pred_check
    _
  $region19: #{_lambda_.1} parent=0 // pred_check_branch
    %462 = sbr.rel (0) target = $region21
  $region20: #{_lambda_.1} parent=0 // pred_region
    _
  $region21: #{_lambda_.1} parent=0 // pred_fallthru
    _
  // Predicated region
  $region22: #{_lambda_.1} parent=0 // pred_check
    _
  $region23: #{_lambda_.1} parent=0 // pred_check_branch
    %464 = sbr.rel (0) target = $region25
  $region24: #{_lambda_.1} parent=0 // pred_region
    _
  $region25: #{_lambda_.1} parent=0 // pred_fallthru
    _
  // Predicated region
  $region26: #{_lambda_.1} parent=0 // pred_check
    _
  $region27: #{_lambda_.1} parent=0 // pred_check_branch
    %466 = sbr.rel (0) target = $region29
  $region28: #{_lambda_.1} parent=0 // pred_region
    _
  $region29: #{_lambda_.1} parent=0 // pred_fallthru
    _
  // Predicated region
  $region30: #{_lambda_.1} parent=0 // pred_check
    _
  $region31: #{_lambda_.1} parent=0 // pred_check_branch
    %468 = sbr.rel (0) target = $region33
  $region32: #{_lambda_.1} parent=0 // pred_region
    _
  $region33: #{_lambda_.1} parent=0 // pred_fallthru
    _
  // Predicated region
  $region34: #{_lambda_.1} parent=0 // pred_check
    _
  $region35: #{_lambda_.1} parent=0 // pred_check_branch
    %470 = sbr.rel (0) target = $region37
  $region36: #{_lambda_.1} parent=0 // pred_region
    _
  $region37: #{_lambda_.1} parent=0 // pred_fallthru
    _
  // Predicated region
  $region38: #{_lambda_.1} parent=0 // pred_check
    _
  $region39: #{_lambda_.1} parent=0 // pred_check_branch
    %472 = sbr.rel (0) target = $region41
  $region40: #{_lambda_.1} parent=0 // pred_region
    _
  $region41: #{_lambda_.1} parent=0 // pred_fallthru
    _

</llo_original>
